<compile_context>
chip_gen: v5e
topology: v5e:2x2
jax: 0.10.0
libtpu: 0.0.40
codegen_flags: <defaults>
</compile_context>

<pallas_src>
import functools

import jax
import jax.numpy as jnp
from jax.experimental import pallas as pl
from jax.experimental.pallas import tpu as pltpu


def _ls_ce_kernel(x_ref, labels_ref, loss_ref, *,
                  confidence: float, smooth_over_c: float):
    x = x_ref[...].astype(jnp.float32)            # (TN, C) f32 working copy
    labels = labels_ref[...]                      # (TN, 1) int32

    # Stable logsumexp per row:  logZ = log(sum exp(x - max)) + max
    x_max = jnp.max(x, axis=1, keepdims=True)                       # (TN, 1)
    sum_exp = jnp.sum(jnp.exp(x - x_max), axis=1, keepdims=True)    # (TN, 1)
    logz = jnp.log(sum_exp) + x_max                                 # (TN, 1)

    # Fused one-hot gather of x[n, target[n]] (no f32 one-hot / extra multiply).
    col = jax.lax.broadcasted_iota(jnp.int32, x.shape, 1)           # (TN, C)
    x_tgt = jnp.sum(jnp.where(col == labels, x, 0.0),
                    axis=1, keepdims=True)                          # (TN, 1)

    # sum_c x[n, c]   (mean folded into the smooth_over_c constant)
    x_sum = jnp.sum(x, axis=1, keepdims=True)                       # (TN, 1)

    # confidence*(logZ - x_tgt) + smoothing*(logZ - mean_x)
    #   == logZ - confidence*x_tgt - (smoothing/C)*sum_x      (conf+smooth == 1)
    loss_ref[...] = logz - confidence * x_tgt - smooth_over_c * x_sum


def label_smoothing_cross_entropy(logits, target, *,
                                  smoothing: float = 0.1,
                                  reduction: str = 'mean',
                                  block_n: int | None = None):
    """Label-smoothing cross entropy.

    Args:
      logits: (N, C) float array. bf16 inputs are encouraged (halves HBM
        traffic); the kernel upcasts to f32 in VMEM for the softmax math.
      target: (N,) integer labels in [0, C).
      smoothing / reduction: as in the PyTorch module.
      block_n: rows per grid step (auto-sized from a VMEM budget if None).
    """
    n, c = logits.shape
    in_bytes = jnp.dtype(logits.dtype).itemsize

    if block_n is None:
        # VMEM budget per grid step, counting BOTH the double-buffered input
        # tile and the ~4 (TN, C)-sized in-kernel temporaries (f32 x, exp
        # pass, int32 iota, where-select).  ~36 MiB keeps us inside v7x's
        # 64 MiB physical VMEM with headroom and far below v5e/v6e's 128 MiB.
        budget_bytes = 36 * 1024 * 1024
        bytes_per_row = c * (2 * in_bytes + 4 * 4)
        block_n = budget_bytes // max(bytes_per_row, 1)
        block_n = max(8, min(2048, block_n))
    block_n = max(8, (block_n // 8) * 8)            # sublane multiple of 8
    block_n = min(block_n, ((n + 7) // 8) * 8)      # don't over-tile tiny N

    grid = (pl.cdiv(n, block_n),)                   # ragged last block is OK

    lbl = target.astype(jnp.int32).reshape(n, 1)

    # Explicit scoped-VMEM limit: estimated use (2x input buffers + ~4 f32
    # temporaries) with slack, clamped to stay safe on every generation
    # (v5e 16 MiB default is the first to reject larger tiles; v7x has only
    # 64 MiB physical, so cap below that).
    est_vmem = block_n * c * (2 * in_bytes + 16) + (1 << 20)
    vmem_limit = int(min(max(est_vmem * 5 // 4, 32 << 20), 60 << 20))

    kernel = functools.partial(
        _ls_ce_kernel,
        confidence=float(1.0 - smoothing),
        smooth_over_c=float(smoothing / c))

    per_row = pl.pallas_call(
        kernel,
        out_shape=jax.ShapeDtypeStruct((n, 1), jnp.float32),
        grid=grid,
        in_specs=[
            pl.BlockSpec((block_n, c), lambda i: (i, 0)),   # logits tile
            pl.BlockSpec((block_n, 1), lambda i: (i, 0)),   # labels tile
        ],
        out_specs=pl.BlockSpec((block_n, 1), lambda i: (i, 0)),
        compiler_params=pltpu.CompilerParams(
            dimension_semantics=("parallel",),
            vmem_limit_bytes=vmem_limit),
    )(logits, lbl)

    loss = per_row[:, 0]
    if reduction == 'mean':
        return jnp.mean(loss)
    elif reduction == 'sum':
        return jnp.sum(loss)
    elif reduction == 'none':
        return loss
    else:
        raise ValueError(f'Unsupported reduction: {reduction}')


def _reference_loss(x, target, smoothing, reduction):
    """Plain-JAX reference matching the PyTorch module."""
    logprobs = jax.nn.log_softmax(x.astype(jnp.float32), axis=-1)
    nll = -jnp.take_along_axis(logprobs, target[:, None], axis=-1)[:, 0]
    smooth = -jnp.mean(logprobs, axis=-1)
    loss = (1.0 - smoothing) * nll + smoothing * smooth
    if reduction == 'mean':
        return jnp.mean(loss)
    elif reduction == 'sum':
        return jnp.sum(loss)
    return loss


if __name__ == "__main__":
    SMOOTHING = 0.1

    # N not a multiple of the tile -> exercises the ragged last block
    # (no host-side padding copy is made).
    N, C = 20, 128
    key = jax.random.PRNGKey(0)
    k1, k2 = jax.random.split(key)
    logits = jax.random.normal(k1, (N, C), dtype=jnp.float32)
    labels = jax.random.randint(k2, (N,), 0, C, dtype=jnp.int32)

    # Small block to exercise a multi-step grid (3 tiles of 8 rows, last ragged).
    out_mean = label_smoothing_cross_entropy(
        logits, labels, smoothing=SMOOTHING, reduction='mean', block_n=8)
    out_mean = jax.block_until_ready(out_mean)
    ref_mean = _reference_loss(logits, labels, SMOOTHING, 'mean')
    assert jnp.allclose(out_mean, ref_mean, rtol=1e-4, atol=1e-5), (out_mean, ref_mean)

    out_sum = label_smoothing_cross_entropy(
        logits, labels, smoothing=SMOOTHING, reduction='sum', block_n=8)
    out_sum = jax.block_until_ready(out_sum)
    ref_sum = _reference_loss(logits, labels, SMOOTHING, 'sum')
    assert jnp.allclose(out_sum, ref_sum, rtol=1e-4, atol=1e-4), (out_sum, ref_sum)

    out_none = label_smoothing_cross_entropy(
        logits, labels, smoothing=SMOOTHING, reduction='none', block_n=8)
    out_none = jax.block_until_ready(out_none)
    ref_none = _reference_loss(logits, labels, SMOOTHING, 'none')
    assert jnp.allclose(out_none, ref_none, rtol=1e-4, atol=1e-5)

    # Auto block size + bf16 inputs (recommended path: halves HBM traffic).
    logits_bf16 = logits.astype(jnp.bfloat16)
    out_bf16 = label_smoothing_cross_entropy(
        logits_bf16, labels, smoothing=SMOOTHING, reduction='mean')
    out_bf16 = jax.block_until_ready(out_bf16)
    ref_bf16 = _reference_loss(logits_bf16, labels, SMOOTHING, 'mean')
    assert jnp.allclose(out_bf16, ref_bf16, rtol=2e-2, atol=2e-2), (out_bf16, ref_bf16)

    print("KERNEL_OK")
</pallas_src>

<mosaic_0001>
module attributes {stable_mosaic.version = 11 : i64} {
  func.func @_ls_ce_kernel(%arg0: i32, %arg1: memref<8x128xf32, #tpu.memory_space<vmem>>, %arg2: memref<8x1xi32, #tpu.memory_space<vmem>>, %arg3: memref<8x1xf32, #tpu.memory_space<vmem>>) attributes {dimension_semantics = [#tpu.dimension_semantics<parallel>], iteration_bounds = array<i64: 3>, scalar_prefetch = 0 : i64, scratch_operands = 0 : i64, tpu.core_type = #tpu.core_type<tc>, window_params = [{transform_indices = @transform_0, window_bounds = array<i64: 8, 128>}, {transform_indices = @transform_1, window_bounds = array<i64: 8, 1>}, {transform_indices = @transform_2, window_bounds = array<i64: 8, 1>}]} {
    %c0 = arith.constant 0 : index
    %c0_0 = arith.constant 0 : index
    %0 = vector.load %arg1[%c0, %c0_0] : memref<8x128xf32, #tpu.memory_space<vmem>>, vector<8x128xf32>
    %c0_1 = arith.constant 0 : index
    %c0_2 = arith.constant 0 : index
    %1 = vector.load %arg2[%c0_1, %c0_2] : memref<8x1xi32, #tpu.memory_space<vmem>>, vector<8x1xi32>
    %cst = arith.constant dense<0xFF800000> : vector<8xf32>
    %2 = vector.multi_reduction <maximumf>, %0, %cst [1] : vector<8x128xf32> to vector<8xf32>
    %3 = vector.shape_cast %2 : vector<8xf32> to vector<8x1xf32>
    %4 = vector.broadcast %3 : vector<8x1xf32> to vector<8x128xf32>
    %5 = arith.subf %0, %4 : vector<8x128xf32>
    %6 = math.exp %5 : vector<8x128xf32>
    %cst_3 = arith.constant dense<0.000000e+00> : vector<8xf32>
    %7 = vector.multi_reduction <add>, %6, %cst_3 [1] : vector<8x128xf32> to vector<8xf32>
    %8 = vector.shape_cast %7 : vector<8xf32> to vector<8x1xf32>
    %9 = math.log %8 : vector<8x1xf32>
    %10 = arith.addf %9, %3 : vector<8x1xf32>
    %11 = tpu.iota {dimensions = array<i32: 1>} : vector<8x128xi32>
    %12 = vector.broadcast %1 : vector<8x1xi32> to vector<8x128xi32>
    %13 = arith.cmpi eq, %11, %12 : vector<8x128xi32>
    %cst_4 = arith.constant 0.000000e+00 : f32
    %14 = vector.broadcast %cst_4 : f32 to vector<8x128xf32>
    %15 = arith.select %13, %0, %14 : vector<8x128xi1>, vector<8x128xf32>
    %cst_5 = arith.constant dense<0.000000e+00> : vector<8xf32>
    %16 = vector.multi_reduction <add>, %15, %cst_5 [1] : vector<8x128xf32> to vector<8xf32>
    %17 = vector.shape_cast %16 : vector<8xf32> to vector<8x1xf32>
    %cst_6 = arith.constant dense<0.000000e+00> : vector<8xf32>
    %18 = vector.multi_reduction <add>, %0, %cst_6 [1] : vector<8x128xf32> to vector<8xf32>
    %19 = vector.shape_cast %18 : vector<8xf32> to vector<8x1xf32>
    %cst_7 = arith.constant 0.899999976 : f32
    %20 = vector.broadcast %cst_7 : f32 to vector<8x1xf32>
    %21 = arith.mulf %20, %17 : vector<8x1xf32>
    %22 = arith.subf %10, %21 : vector<8x1xf32>
    %cst_8 = arith.constant 7.812500e-04 : f32
    %23 = vector.broadcast %cst_8 : f32 to vector<8x1xf32>
    %24 = arith.mulf %23, %19 : vector<8x1xf32>
    %25 = arith.subf %22, %24 : vector<8x1xf32>
    %c0_9 = arith.constant 0 : index
    %c0_10 = arith.constant 0 : index
    %26 = vector.load %arg3[%c0_9, %c0_10] : memref<8x1xf32, #tpu.memory_space<vmem>>, vector<8x1xf32>
    tpu.vector_store %arg3[%c0_9, %c0_10], %25 {strides = array<i32>} : memref<8x1xf32, #tpu.memory_space<vmem>>, vector<8x1xf32>,
    return
  }
  func.func @transform_0(%arg0: i32) -> (i32, i32) {
    %c0_i32 = arith.constant 0 : i32
    %c0_i32_0 = arith.constant 0 : i32
    return %arg0, %c0_i32 : i32, i32
  }
  func.func @transform_1(%arg0: i32) -> (i32, i32) {
    %c0_i32 = arith.constant 0 : i32
    %c0_i32_0 = arith.constant 0 : i32
    return %arg0, %c0_i32 : i32, i32
  }
  func.func @transform_2(%arg0: i32) -> (i32, i32) {
    %c0_i32 = arith.constant 0 : i32
    %c0_i32_0 = arith.constant 0 : i32
    return %arg0, %c0_i32 : i32, i32
  }
}

</mosaic_0001>

<llo_original>
// kernel: tpu_custom_call.1
$region0: #{tpu_custom_call.1}
  #allocation0 [shape = 'u32[]', space=smem, size = 0x4, offset = 0x4, fixed_abs, tag = 'smem constant byte address 0x4 - core index']
  #allocation1 [shape = 'u32[72,128]{1,0:T(1,128)}', space=vmem, size = 0x9000, scoped, tag = 'internal scratch']
  %s0 = inlined_call_operand.vmem [shape: f32[20,128], index: 0, kind: input, shape index: {}]
  %s1 = inlined_call_operand.vmem [shape: s32[20,1], index: 1, kind: input, shape index: {}]
  %s2 = inlined_call_operand.vmem [shape: f32[20,1], index: 2, kind: output, shape index: {}]
  %s3 = sld [smem:[#allocation0]]
  $region41: #{tpu_custom_call.1} parent=0
    _
  %s5 = ssub.s32 1, %s3
  %s6 = scalar_select 0, %s5, %s3
  loop: start=0, step=1, limit=5
  $region2: #{tpu_custom_call.1} parent=0 // loop_pre_header
    _
  $region3: #{tpu_custom_call.1} parent=0 // loop_header
    %s8 = sphi 0, %s12
    %p9 = scmp.ge.s32.totalorder %s8, 5
    %s18 = sphi 0, %s20
    %s21 = sphi 0, %s18
    %s22 = sphi 0, %s21
    %s38 = sphi 0, %s22
    %s44 = sphi 0, %s46
    %s47 = sphi 0, %s44
    %s48 = sphi 0, %s47
    %s64 = sphi 0, %s48
    %s70 = sphi 0, %s72
    %s73 = sphi 0, %s70
    %s74 = sphi 0, %s73
    %s90 = sphi 0, %s74
  $region4: #{tpu_custom_call.1} parent=0 // loop_header_branch
    %11 = sbr.rel (%p9) target = $region8
  $region5: #{tpu_custom_call.1} parent=0 // loop_body
    %s13 = ssub.s32 %s8, 1
    %s14 = ssub.s32 %s8, 2
    %s15 = sadd.s32 %s8, 1
    %s16 = ssub.s32 %s8, %s15
    %p17 = scmp.eq.s32.totalorder %s16, 0
    %s19 = sadd.s32 %s18, 1
    %s20 = scalar_select %p17, %s18, %s19
    %p23 = pneg %p17
    %p24 = scmp.eq.s32.totalorder %s8, 2
    %p25 = por %p23, %p24
    %p26 = scmp.ne.s32.totalorder %s18, %s21
    %p27 = scmp.eq.s32.totalorder %s8, 0
    %p28 = por %p26, %p27
    %p29 = scmp.ne.s32.totalorder %s18, %s21
    %p30 = scmp.eq.s32.totalorder %s13, 2
    %p31 = por %p29, %p30
    %p32 = scmp.ne.s32.totalorder %s21, %s22
    %p33 = scmp.eq.s32.totalorder %s13, 0
    %p34 = por %p32, %p33
    %p35 = scmp.ne.s32.totalorder %s21, %s22
    %p36 = scmp.eq.s32.totalorder %s14, 2
    %p37 = por %p35, %p36
    %p39 = scmp.ne.s32.totalorder %s22, %s38
    %p40 = scmp.eq.s32.totalorder %s14, 0
    %p41 = por %p39, %p40
    %s42 = ssub.s32 %s8, %s15
    %p43 = scmp.eq.s32.totalorder %s42, 0
    %s45 = sadd.s32 %s44, 1
    %s46 = scalar_select %p43, %s44, %s45
    %p49 = pneg %p43
    %p50 = scmp.eq.s32.totalorder %s8, 2
    %p51 = por %p49, %p50
    %p52 = scmp.ne.s32.totalorder %s44, %s47
    %p53 = scmp.eq.s32.totalorder %s8, 0
    %p54 = por %p52, %p53
    %p55 = scmp.ne.s32.totalorder %s44, %s47
    %p56 = scmp.eq.s32.totalorder %s13, 2
    %p57 = por %p55, %p56
    %p58 = scmp.ne.s32.totalorder %s47, %s48
    %p59 = scmp.eq.s32.totalorder %s13, 0
    %p60 = por %p58, %p59
    %p61 = scmp.ne.s32.totalorder %s47, %s48
    %p62 = scmp.eq.s32.totalorder %s14, 2
    %p63 = por %p61, %p62
    %p65 = scmp.ne.s32.totalorder %s48, %s64
    %p66 = scmp.eq.s32.totalorder %s14, 0
    %p67 = por %p65, %p66
    %s68 = ssub.s32 %s8, %s15
    %p69 = scmp.eq.s32.totalorder %s68, 0
    %s71 = sadd.s32 %s70, 1
    %s72 = scalar_select %p69, %s70, %s71
    %p75 = pneg %p69
    %p76 = scmp.eq.s32.totalorder %s8, 2
    %p77 = por %p75, %p76
    %p78 = scmp.ne.s32.totalorder %s70, %s73
    %p79 = scmp.eq.s32.totalorder %s8, 0
    %p80 = por %p78, %p79
    %p81 = scmp.ne.s32.totalorder %s70, %s73
    %p82 = scmp.eq.s32.totalorder %s13, 2
    %p83 = por %p81, %p82
    %p84 = scmp.ne.s32.totalorder %s73, %s74
    %p85 = scmp.eq.s32.totalorder %s13, 0
    %p86 = por %p84, %p85
    %p87 = scmp.ne.s32.totalorder %s73, %s74
    %p88 = scmp.eq.s32.totalorder %s14, 2
    %p89 = por %p87, %p88
    %p91 = scmp.ne.s32.totalorder %s74, %s90
    %p92 = scmp.eq.s32.totalorder %s14, 0
    %p93 = por %p91, %p92
    %p94 = scmp.le.s32.totalorder 1, %s8
    %p95 = scmp.lt.s32.totalorder %s8, 4
    %p96 = pnand %p94, %p95
    %p97 = pneg %p96
    // Predicated region
    $region9: #{tpu_custom_call.1} parent=5 // pred_check
      _
    $region10: #{tpu_custom_call.1} parent=5 // pred_check_branch
      %99 = sbr.rel (%p96) target = $region12
    $region11: #{tpu_custom_call.1} parent=5 // pred_region
      %s100 = ssub.s32 %s8, 1
    $region12: #{tpu_custom_call.1} parent=5 // pred_fallthru
      _
    %p101 = scmp.lt.s32.totalorder %s8, 3
    // Predicated region
    $region13: #{tpu_custom_call.1} parent=5 // pred_check
      %p102 = pneg %p101
    $region14: #{tpu_custom_call.1} parent=5 // pred_check_branch
      %104 = sbr.rel (%p102) target = $region16
    $region15: #{tpu_custom_call.1} parent=5 // pred_region
      // Predicated region
      $region17: #{tpu_custom_call.1} parent=15 // pred_check
        %p105 = pneg %p28
      $region18: #{tpu_custom_call.1} parent=15 // pred_check_branch
        %107 = sbr.rel (%p105) target = $region20
      $region19: #{tpu_custom_call.1} parent=15 // pred_region
        %p108 = scmp.lt.s32.totalorder %s8, 2
        %s109 = scalar_select %p108, %s8, 2
        %s110 = smul.addr %s109, 8
        %s111 = scalar_lea.vmem %s0, %s110
      $region20: #{tpu_custom_call.1} parent=15 // pred_fallthru
        _
      // Predicated region
      $region21: #{tpu_custom_call.1} parent=15 // pred_check
        %p112 = pneg %p54
      $region22: #{tpu_custom_call.1} parent=15 // pred_check_branch
        %114 = sbr.rel (%p112) target = $region24
      $region23: #{tpu_custom_call.1} parent=15 // pred_region
        %p115 = scmp.lt.s32.totalorder %s8, 2
        %s116 = scalar_select %p115, %s8, 2
        %s117 = smul.addr %s116, 8
        %s118 = scalar_lea.vmem %s1, %s117
      $region24: #{tpu_custom_call.1} parent=15 // pred_fallthru
        _
    $region16: #{tpu_custom_call.1} parent=5 // pred_fallthru
      _
    %p119 = scmp.le.s32.totalorder 1, %s8
    %p120 = scmp.lt.s32.totalorder %s8, 4
    %p121 = pnand %p119, %p120
    %p122 = pneg %p121
    // Predicated region
    $region25: #{tpu_custom_call.1} parent=5 // pred_check
      _
    $region26: #{tpu_custom_call.1} parent=5 // pred_check_branch
      %124 = sbr.rel (%p121) target = $region28
    $region27: #{tpu_custom_call.1} parent=5 // pred_region
      %s125 = ssub.s32 %s8, 1
      %p126 = scmp.lt.s32.totalorder %s13, 2
      %s127 = scalar_select %p126, %s13, 2
      %s128 = smul.addr %s127, 8
      %s129 = scalar_lea.vmem %s0, %s128
      %p130 = pneg %p34
      %p131 = pneg %p31
      %p132 = scmp.lt.s32.totalorder %s13, 2
      %s133 = scalar_select %p132, %s13, 2
      %s134 = smul.addr %s133, 8
      %s135 = scalar_lea.vmem %s1, %s134
      %p136 = pneg %p60
      %p137 = pneg %p57
      %p138 = pneg %p86
      %p139 = pneg %p83
      %p140 = scmp.lt.s32.totalorder %s13, 2
      %s141 = scalar_select %p140, %s13, 2
      %s142 = smul.addr %s141, 8
      %s143 = scalar_lea.vmem %s2, %s142
      %p144 = scmp.lt.s32.totalorder %s13, 2
      %s145 = scalar_select %p144, %s13, 2
      %s146 = smul.addr %s145, 8
      %s147 = scalar_lea.vmem %s0, %s146
      %p148 = scmp.lt.s32.totalorder %s13, 2
      %s149 = scalar_select %p148, %s13, 2
      %s150 = smul.addr %s149, 8
      %s151 = scalar_lea.vmem %s1, %s150
      %p152 = scmp.lt.s32.totalorder %s13, 2
      %s153 = scalar_select %p152, %s13, 2
      %s154 = smul.addr %s153, 8
      %s155 = scalar_lea.vmem %s2, %s154
      %v156 = vld [vmem:[%s147] sm:$0xff]
      %v157 = vld [vmem:[%s151] sm:$0xff]
      %158 = vmax.xlane.f32.xlu0 %v156
      %v159 = vpop.xlane.xlu0 %158
      %v160 = vsub.f32 %v156, %v159
      %v161 = vmul.f32 %v160, 1.442695
      %v162 = vpow.pop %v161
      %163 = vadd.xlane.f32.xlu0 %v162
      %v164 = vpop.xlane.xlu0 %163
      %v165 = vlog2.pop %v164
      %v166 = vmul.f32 %v165, 0.6931472
      %v167 = vadd.f32 %v166, %v159
      %v168 = vlaneseq
      %v169 = vand.u32 %v168, 127
      %170 = vset.pattern.permute.xlu0 0
      %171 = vperm.xlu0 %170, %v157
      %v172 = vpop.permute.xlu0 %171
      %vm173 = vcmp.eq.s32.totalorder %v169, %v172
      %v174 = vsel %vm173, %v156, 0.0
      %175 = vadd.xlane.f32.xlu0 %v174
      %v176 = vpop.xlane.xlu0 %175
      %177 = vadd.xlane.f32.xlu0 %v156
      %v178 = vpop.xlane.xlu0 %177
      %v179 = vmul.f32 %v176, 0.9
      %v180 = vsub.f32 %v167, %v179
      %v181 = vmul.f32 %v178, 0.00078125
      %v182 = vsub.f32 %v180, %v181
      %vm183 = vcmask 7168
      %184 = vst.msk [vmem:[%s155] sm:$0xff] %vm183, %v182
      %p185 = scmp.lt.s32.totalorder %s13, 2
      %s186 = scalar_select %p185, %s13, 2
      %s187 = smul.addr %s186, 8
      %s188 = scalar_lea.vmem %s2, %s187
      // Predicated region
      $region29: #{tpu_custom_call.1} parent=27 // pred_check
        %p189 = pneg %p83
      $region30: #{tpu_custom_call.1} parent=27 // pred_check_branch
        %191 = sbr.rel (%p189) target = $region32
      $region31: #{tpu_custom_call.1} parent=27 // pred_region
        _
      $region32: #{tpu_custom_call.1} parent=27 // pred_fallthru
        _
    $region28: #{tpu_custom_call.1} parent=5 // pred_fallthru
      _
    %p192 = scmp.le.s32.totalorder 2, %s8
    // Predicated region
    $region33: #{tpu_custom_call.1} parent=5 // pred_check
      %p193 = pneg %p192
    $region34: #{tpu_custom_call.1} parent=5 // pred_check_branch
      %195 = sbr.rel (%p193) target = $region36
    $region35: #{tpu_custom_call.1} parent=5 // pred_region
      %s196 = ssub.s32 %s8, 2
      // Predicated region
      $region37: #{tpu_custom_call.1} parent=35 // pred_check
        %p197 = pneg %p89
      $region38: #{tpu_custom_call.1} parent=35 // pred_check_branch
        %199 = sbr.rel (%p197) target = $region40
      $region39: #{tpu_custom_call.1} parent=35 // pred_region
        %p200 = scmp.lt.s32.totalorder %s14, 2
        %s201 = scalar_select %p200, %s14, 2
        %s202 = smul.addr %s201, 8
        %s203 = scalar_lea.vmem %s2, %s202
      $region40: #{tpu_custom_call.1} parent=35 // pred_fallthru
        _
    $region36: #{tpu_custom_call.1} parent=5 // pred_fallthru
      _
  $region6: #{tpu_custom_call.1} parent=0 // loop_footer
    %s12 = sadd.s32 1, %s8
  $region7: #{tpu_custom_call.1} parent=0 // loop_footer_branch
    %7 = sbr.rel target = $region3
  $region8: #{tpu_custom_call.1} parent=0 // loop_exit
    _

</llo_original>
